<compile_context>
chip_gen: v5e
topology: v5e:2x2
jax: 0.10.0
libtpu: 0.0.40
codegen_flags: <defaults>
</compile_context>

<pallas_src>
import functools
import math

import jax
import jax.numpy as jnp
from jax.experimental import pallas as pl
from jax.experimental.pallas import tpu as pltpu

_EPS = 1e-5          # PyTorch BatchNorm2d default eps
_NEG_SLOPE = 0.2     # LeakyReLU negative slope


# ----------------------------------------------------------------------------
# Pass 1: conv as one folded-K MXU dot per tile (bf16 x bf16 -> f32 acc)
#         + per-tile partial BatchNorm statistics (sum, sum-of-squares).
# ----------------------------------------------------------------------------
def conv_stats_kernel(x_ref, w_ref, y_ref, stats_ref, *, tho, wo, row_align):
    t = pl.program_id(1)
    row0 = t * tho                                     # first output row of tile
    if row_align > 1:
        row0 = pl.multiple_of(row0, row_align)
    # Window covering both row-parities of this tile: (tho+1, ws, c4), bf16.
    win = x_ref[pl.ds(row0, tho + 1), :, :]
    c4 = win.shape[-1]

    # Fold the four 2x2 taps into the contraction dim: (tho*wo, 4*c4).
    taps = []
    for p in (0, 1):
        for q in (0, 1):
            taps.append(win[p:p + tho, q:q + wo, :].reshape(tho * wo, c4))
    lhs = jnp.concatenate(taps, axis=-1)

    acc = jnp.dot(lhs, w_ref[...], preferred_element_type=jnp.float32)

    y_ref[...] = acc.astype(y_ref.dtype)               # bf16 intermediate
    # Single-pass statistics from the f32 accumulator (VMEM resident).
    stats_ref[0:1, :] = jnp.sum(acc, axis=0, keepdims=True)
    stats_ref[1:2, :] = jnp.sum(acc * acc, axis=0, keepdims=True)


# ----------------------------------------------------------------------------
# Pass 2: BatchNorm (precomputed global batch scale/shift) + LeakyReLU(0.2),
#         streamed over lane-dense (rows, pack*Cout) tiles.
# ----------------------------------------------------------------------------
def bn_lrelu_kernel(y_ref, scale_ref, shift_ref, o_ref):
    z = y_ref[...].astype(jnp.float32) * scale_ref[...] + shift_ref[...]
    o_ref[...] = jnp.where(z >= 0, z, _NEG_SLOPE * z)


# ----------------------------------------------------------------------------
# Tile-size / VMEM-budget helpers (generation-aware: 64 MiB v7x, 128 MiB else)
# ----------------------------------------------------------------------------
def _vmem_capacity_bytes():
    try:
        return int(pltpu.get_tpu_info().vmem_capacity_bytes)
    except Exception:
        return 64 * 1024 * 1024          # conservative (v7x) fallback


def _pick_conv_tile(ho, wo, hs, ws, c4, cout, budget):
    """Largest row-tile (divisor of Ho, 8-aligned tho*wo) fitting `budget`."""
    target_rows = 4096 if cout <= 128 else 2048
    resident = (2 * hs * ws * c4 * 2          # double-buffered bf16 s2d image
                + 2 * 4 * c4 * cout * 2       # double-buffered folded weights
                + 2 * 2 * cout * 4)           # stats tiles

    def footprint(d):
        s = d * wo
        out_tile = 2 * s * cout * 2                               # bf16, x2 bufs
        tmp = (d + 1) * ws * c4 * 2 + s * 4 * c4 * 2 + s * cout * 4
        return resident + out_tile + tmp

    cands = [d for d in range(1, ho + 1)
             if ho % d == 0 and (d * wo) % 8 == 0
             and d * wo <= max(target_rows, wo)]
    for d in sorted(cands, reverse=True):
        if footprint(d) <= budget:
            return d
    if cands:
        return cands[0]          # smallest aligned tile (soft budget exceeded)
    return ho                    # full image: block dim == array dim is legal


def _pick_pack(m, cout, max_lanes=4096):
    """Smallest divisor p of m with p*cout >= 128 (lane-dense pass-2 tiles)."""
    if cout >= 128:
        return 1
    best = 1
    for p in range(1, max_lanes // max(cout, 1) + 1):
        if m % p:
            continue
        best = p
        if p * cout >= 128:
            return p
    return best


def _pick_bn_tile(rows, lanes, budget):
    """8-aligned pass-2 row tile; never falls back to an unbounded full block."""
    per_row = 2 * lanes * 2 + 2 * lanes * 4      # bf16 in + f32 out, x2 buffers
    tm = budget // max(per_row, 1)
    tm = max(8, min(tm, 8192))
    tm = (tm // 8) * 8
    if tm >= rows:
        return rows                              # full dim block is always legal
    return max(8, tm)


# ----------------------------------------------------------------------------
# Forward wrapper
# ----------------------------------------------------------------------------
@functools.partial(jax.jit, static_argnames=("compute_dtype",))
def unet_down_forward(x_nchw, w_oihw, gamma, beta, *,
                      compute_dtype=jnp.bfloat16):
    """UNetDown forward:  (N, Cin, H, W) f32 -> (N, Cout, H//2, W//2) f32."""
    n, cin, h, w = x_nchw.shape
    cout = w_oihw.shape[0]
    if h % 2 or w % 2:
        raise ValueError("UNetDown (k=4, s=2, p=1) expects even spatial dims.")
    ho, wo = h // 2, w // 2
    hs, ws = ho + 1, wo + 1                  # space-to-depth spatial dims
    c4 = 4 * cin
    m = n * ho * wo

    vmem_cap = _vmem_capacity_bytes()
    budget = int(vmem_cap * 0.5)             # soft budget for tile selection
    vmem_limit = int(vmem_cap * 0.85)        # scoped VMEM limit for Mosaic

    # ---- glue: layout only (pad + space-to-depth, ~1x input bytes) ---------
    x_nhwc = jnp.transpose(x_nchw, (0, 2, 3, 1))
    xp = jnp.pad(x_nhwc, ((0, 0), (1, 1), (1, 1), (0, 0)))
    # channel index of s2d = (a*2 + b)*Cin + c  (a = H-parity, b = W-parity)
    s2d = xp.reshape(n, hs, 2, ws, 2, cin).transpose(0, 1, 3, 2, 4, 5)
    s2d = s2d.reshape(n, hs, ws, c4).astype(compute_dtype)
    # weights (Cout, Cin, 4, 4) -> folded K = (tap=2p+q)*c4 + (a*2+b)*Cin + c
    w6 = w_oihw.reshape(cout, cin, 2, 2, 2, 2)            # (o, c, p, a, q, b)
    w_folded = jnp.transpose(w6, (2, 4, 3, 5, 1, 0)).reshape(4 * c4, cout)
    w_folded = w_folded.astype(compute_dtype)

    # ---- pass 1: conv + partial batch statistics ---------------------------
    tho = _pick_conv_tile(ho, wo, hs, ws, c4, cout, budget)
    t_tiles = ho // tho
    row_align = math.gcd(tho, 8)
    itemsize = jnp.dtype(compute_dtype).itemsize
    cost1 = pl.CostEstimate(
        flops=2 * m * (16 * cin) * cout,
        transcendentals=0,
        bytes_accessed=(n * hs * ws * c4 * itemsize
                        + 16 * cin * cout * itemsize
                        + m * cout * itemsize
                        + n * t_tiles * 2 * cout * 4))
    # v7x megacore: shard the batch axis; sharding the row-tile axis would
    # duplicate the whole-image input DMA on both cores.
    sem1 = ("parallel", "arbitrary") if n > 1 else ("parallel", "parallel")

    conv_out, stats = pl.pallas_call(
        functools.partial(conv_stats_kernel, tho=tho, wo=wo,
                          row_align=row_align),
        out_shape=(jax.ShapeDtypeStruct((n, ho * wo, cout), compute_dtype),
                   jax.ShapeDtypeStruct((n, t_tiles, 2, cout), jnp.float32)),
        grid=(n, t_tiles),
        in_specs=[
            # whole s2d image resident per n; constant block index across the
            # row-tile axis => fetched from HBM once per image.
            pl.BlockSpec((None, hs, ws, c4), lambda nb, tb: (nb, 0, 0, 0)),
            pl.BlockSpec((4 * c4, cout), lambda nb, tb: (0, 0)),
        ],
        out_specs=(
            pl.BlockSpec((None, tho * wo, cout), lambda nb, tb: (nb, tb, 0)),
            pl.BlockSpec((None, None, 2, cout), lambda nb, tb: (nb, tb, 0, 0)),
        ),
        compiler_params=pltpu.CompilerParams(
            dimension_semantics=sem1, vmem_limit_bytes=vmem_limit),
        cost_estimate=cost1,
    )(s2d, w_folded)

    # ---- tiny O(Cout) finalize: global batch mean / biased variance --------
    gamma32 = gamma.astype(jnp.float32)
    beta32 = beta.astype(jnp.float32)
    sums = jnp.sum(stats, axis=(0, 1))                    # (2, Cout)
    mean = sums[0] / m
    var = jnp.maximum(sums[1] / m - mean * mean, 0.0)     # biased, training mode
    inv_std = jax.lax.rsqrt(var + _EPS)
    scale = gamma32 * inv_std
    shift = beta32 - mean * scale

    # ---- pass 2: lane-dense BN(batch stats) + LeakyReLU(0.2) ---------------
    pack = _pick_pack(m, cout)                 # free row-major re-view in HBM
    lanes = pack * cout
    rows = m // pack
    y2 = conv_out.reshape(rows, lanes)
    scale2 = jnp.tile(scale, pack).reshape(1, lanes)
    shift2 = jnp.tile(shift, pack).reshape(1, lanes)

    tm2 = _pick_bn_tile(rows, lanes, budget)
    cost2 = pl.CostEstimate(flops=4 * m * cout, transcendentals=0,
                            bytes_accessed=m * cout * (itemsize + 4))
    y = pl.pallas_call(
        bn_lrelu_kernel,
        out_shape=jax.ShapeDtypeStruct((rows, lanes), jnp.float32),
        grid=(pl.cdiv(rows, tm2),),
        in_specs=[
            pl.BlockSpec((tm2, lanes), lambda i: (i, 0)),
            pl.BlockSpec((1, lanes), lambda i: (0, 0)),
            pl.BlockSpec((1, lanes), lambda i: (0, 0)),
        ],
        out_specs=pl.BlockSpec((tm2, lanes), lambda i: (i, 0)),
        compiler_params=pltpu.CompilerParams(
            dimension_semantics=("parallel",), vmem_limit_bytes=vmem_limit),
        cost_estimate=cost2,
    )(y2, scale2, shift2)

    # ---- glue: back to NCHW -------------------------------------------------
    return jnp.transpose(y.reshape(n, ho, wo, cout), (0, 3, 1, 2))


# ----------------------------------------------------------------------------
# Pure-JAX reference (mirrors bf16 input rounding and bf16 intermediate)
# ----------------------------------------------------------------------------
def _reference(x_nchw, w_oihw, gamma, beta, compute_dtype=jnp.bfloat16):
    xc = x_nchw.astype(compute_dtype).astype(jnp.float32)
    wc = w_oihw.astype(compute_dtype).astype(jnp.float32)
    x_nhwc = jnp.transpose(xc, (0, 2, 3, 1))
    w_hwio = jnp.transpose(wc, (2, 3, 1, 0))
    y = jax.lax.conv_general_dilated(
        x_nhwc, w_hwio, window_strides=(2, 2), padding=((1, 1), (1, 1)),
        dimension_numbers=("NHWC", "HWIO", "NHWC"))
    mean = jnp.mean(y, axis=(0, 1, 2), keepdims=True)
    var = jnp.mean((y - mean) ** 2, axis=(0, 1, 2), keepdims=True)
    yq = y.astype(compute_dtype).astype(jnp.float32)   # bf16 intermediate store
    z = (yq - mean) * jax.lax.rsqrt(var + _EPS) * gamma + beta
    z = jnp.where(z >= 0, z, _NEG_SLOPE * z)
    return jnp.transpose(z, (0, 3, 1, 2))


if __name__ == "__main__":
    # Small shapes consistent with the module: UNetDown(in_size=4, out_size=8)
    N, CIN, H, W = 2, 4, 16, 16
    COUT = 8

    key = jax.random.PRNGKey(0)
    kx, kw, kg, kb = jax.random.split(key, 4)
    x = jax.random.normal(kx, (N, CIN, H, W), dtype=jnp.float32)
    # Conv2d(in, out, 4, 2, 1, bias=False) weight: (out, in, 4, 4)
    w = 0.1 * jax.random.normal(kw, (COUT, CIN, 4, 4), dtype=jnp.float32)
    # BatchNorm2d affine parameters (non-trivial values to exercise the path)
    gamma = 1.0 + 0.1 * jax.random.normal(kg, (COUT,), dtype=jnp.float32)
    beta = 0.1 * jax.random.normal(kb, (COUT,), dtype=jnp.float32)

    out = jax.block_until_ready(unet_down_forward(x, w, gamma, beta))
    ref = _reference(x, w, gamma, beta)

    assert out.shape == (N, COUT, H // 2, W // 2), out.shape
    max_err = float(jnp.max(jnp.abs(out - ref)))
    assert max_err < 3e-2, max_err

    print("KERNEL_OK")
</pallas_src>

<mosaic_0001>
module attributes {stable_mosaic.version = 11 : i64} {
  func.func @bn_lrelu_kernel(%arg0: i32, %arg1: memref<8x128xbf16, #tpu.memory_space<vmem>>, %arg2: memref<1x128xf32, #tpu.memory_space<vmem>>, %arg3: memref<1x128xf32, #tpu.memory_space<vmem>>, %arg4: memref<8x128xf32, #tpu.memory_space<vmem>>) attributes {dimension_semantics = [#tpu.dimension_semantics<parallel>], iteration_bounds = array<i64: 1>, scalar_prefetch = 0 : i64, scratch_operands = 0 : i64, tpu.core_type = #tpu.core_type<tc>, window_params = [{transform_indices = @transform_0, window_bounds = array<i64: 8, 128>}, {pipeline_mode = #tpu.pipeline_mode<synchronous>, transform_indices = @transform_1, window_bounds = array<i64: 1, 128>}, {pipeline_mode = #tpu.pipeline_mode<synchronous>, transform_indices = @transform_2, window_bounds = array<i64: 1, 128>}, {transform_indices = @transform_3, window_bounds = array<i64: 8, 128>}]} {
    %c0 = arith.constant 0 : index
    %c0_0 = arith.constant 0 : index
    %0 = vector.load %arg1[%c0, %c0_0] : memref<8x128xbf16, #tpu.memory_space<vmem>>, vector<8x128xbf16>
    %1 = arith.extf %0 : vector<8x128xbf16> to vector<8x128xf32>
    %c0_1 = arith.constant 0 : index
    %c0_2 = arith.constant 0 : index
    %2 = vector.load %arg2[%c0_1, %c0_2] : memref<1x128xf32, #tpu.memory_space<vmem>>, vector<1x128xf32>
    %3 = vector.broadcast %2 : vector<1x128xf32> to vector<8x128xf32>
    %4 = arith.mulf %1, %3 : vector<8x128xf32>
    %c0_3 = arith.constant 0 : index
    %c0_4 = arith.constant 0 : index
    %5 = vector.load %arg3[%c0_3, %c0_4] : memref<1x128xf32, #tpu.memory_space<vmem>>, vector<1x128xf32>
    %6 = vector.broadcast %5 : vector<1x128xf32> to vector<8x128xf32>
    %7 = arith.addf %4, %6 : vector<8x128xf32>
    %cst = arith.constant 0.000000e+00 : f32
    %8 = vector.broadcast %cst : f32 to vector<8x128xf32>
    %9 = arith.cmpf oge, %7, %8 : vector<8x128xf32>
    %cst_5 = arith.constant 2.000000e-01 : f32
    %10 = vector.broadcast %cst_5 : f32 to vector<8x128xf32>
    %11 = arith.mulf %10, %7 : vector<8x128xf32>
    %12 = arith.select %9, %7, %11 : vector<8x128xi1>, vector<8x128xf32>
    %c0_6 = arith.constant 0 : index
    %c0_7 = arith.constant 0 : index
    %13 = vector.load %arg4[%c0_6, %c0_7] : memref<8x128xf32, #tpu.memory_space<vmem>>, vector<8x128xf32>
    tpu.vector_store %arg4[%c0_6, %c0_7], %12 {strides = array<i32>} : memref<8x128xf32, #tpu.memory_space<vmem>>, vector<8x128xf32>,
    return
  }
  func.func @transform_0(%arg0: i32) -> (i32, i32) {
    %c0_i32 = arith.constant 0 : i32
    %c0_i32_0 = arith.constant 0 : i32
    return %arg0, %c0_i32 : i32, i32
  }
  func.func @transform_1(%arg0: i32) -> (i32, i32) {
    %c0_i32 = arith.constant 0 : i32
    %c0_i32_0 = arith.constant 0 : i32
    %c0_i32_1 = arith.constant 0 : i32
    return %c0_i32, %c0_i32_0 : i32, i32
  }
  func.func @transform_2(%arg0: i32) -> (i32, i32) {
    %c0_i32 = arith.constant 0 : i32
    %c0_i32_0 = arith.constant 0 : i32
    %c0_i32_1 = arith.constant 0 : i32
    return %c0_i32, %c0_i32_0 : i32, i32
  }
  func.func @transform_3(%arg0: i32) -> (i32, i32) {
    %c0_i32 = arith.constant 0 : i32
    %c0_i32_0 = arith.constant 0 : i32
    return %arg0, %c0_i32 : i32, i32
  }
}

module attributes {stable_mosaic.version = 11 : i64} {
  func.func @conv_stats_kernel(%arg0: i32, %arg1: i32, %arg2: memref<1x9x9x16xbf16, #tpu.memory_space<vmem>>, %arg3: memref<64x8xbf16, #tpu.memory_space<vmem>>, %arg4: memref<1x64x8xbf16, #tpu.memory_space<vmem>>, %arg5: memref<1x1x2x8xf32, #tpu.memory_space<vmem>>) attributes {dimension_semantics = [#tpu.dimension_semantics<parallel>, #tpu.dimension_semantics<arbitrary>], iteration_bounds = array<i64: 2, 1>, scalar_prefetch = 0 : i64, scratch_operands = 0 : i64, tpu.core_type = #tpu.core_type<tc>, window_params = [{transform_indices = @transform_0, window_bounds = array<i64: 1, 9, 9, 16>}, {pipeline_mode = #tpu.pipeline_mode<synchronous>, transform_indices = @transform_1, window_bounds = array<i64: 64, 8>}, {transform_indices = @transform_2, window_bounds = array<i64: 1, 64, 8>}, {transform_indices = @transform_3, window_bounds = array<i64: 1, 1, 2, 8>}]} {
    %c8_i32 = arith.constant 8 : i32
    %0 = arith.muli %arg1, %c8_i32 : i32
    %1 = tpu.assume_multiple %0, 8 : i32
    %c0 = arith.constant 0 : index
    %2 = arith.index_cast %1 : i32 to index
    %c0_0 = arith.constant 0 : index
    %c0_1 = arith.constant 0 : index
    %3 = vector.load %arg2[%c0, %2, %c0_0, %c0_1] : memref<1x9x9x16xbf16, #tpu.memory_space<vmem>>, vector<1x9x9x16xbf16>
    %4 = vector.shape_cast %3 : vector<1x9x9x16xbf16> to vector<9x9x16xbf16>
    %5 = vector.extract_strided_slice %4 {offsets = [0, 0, 0], sizes = [8, 8, 16], strides = [1, 1, 1]} : vector<9x9x16xbf16> to vector<8x8x16xbf16>
    %6 = vector.shape_cast %5 : vector<8x8x16xbf16> to vector<64x16xbf16>
    %7 = vector.extract_strided_slice %4 {offsets = [0, 1, 0], sizes = [8, 8, 16], strides = [1, 1, 1]} : vector<9x9x16xbf16> to vector<8x8x16xbf16>
    %8 = vector.shape_cast %7 : vector<8x8x16xbf16> to vector<64x16xbf16>
    %9 = vector.extract_strided_slice %4 {offsets = [1, 0, 0], sizes = [8, 8, 16], strides = [1, 1, 1]} : vector<9x9x16xbf16> to vector<8x8x16xbf16>
    %10 = vector.shape_cast %9 : vector<8x8x16xbf16> to vector<64x16xbf16>
    %11 = vector.extract_strided_slice %4 {offsets = [1, 1, 0], sizes = [8, 8, 16], strides = [1, 1, 1]} : vector<9x9x16xbf16> to vector<8x8x16xbf16>
    %12 = vector.shape_cast %11 : vector<8x8x16xbf16> to vector<64x16xbf16>
    %13 = tpu.concatenate %6, %8, %10, %12 in 1 : vector<64x16xbf16>, vector<64x16xbf16>, vector<64x16xbf16>, vector<64x16xbf16> -> vector<64x64xbf16>
    %c0_2 = arith.constant 0 : index
    %c0_3 = arith.constant 0 : index
    %14 = vector.load %arg3[%c0_2, %c0_3] : memref<64x8xbf16, #tpu.memory_space<vmem>>, vector<64x8xbf16>
    %cst = arith.constant dense<0.000000e+00> : vector<64x8xf32>
    %15 = tpu.matmul %13, %14, %cst {dimension_numbers = #tpu.dot_dimension_numbers<[1], [0], [0], [1], [0, 0, 1, 1], [], []>} : vector<64x64xbf16>, vector<64x8xbf16>, vector<64x8xf32> -> vector<64x8xf32>
    %16 = arith.truncf %15 : vector<64x8xf32> to vector<64x8xbf16>
    %c0_4 = arith.constant 0 : index
    %c0_5 = arith.constant 0 : index
    %c0_6 = arith.constant 0 : index
    %17 = vector.load %arg4[%c0_4, %c0_5, %c0_6] : memref<1x64x8xbf16, #tpu.memory_space<vmem>>, vector<1x64x8xbf16>
    %18 = vector.shape_cast %17 : vector<1x64x8xbf16> to vector<64x8xbf16>
    %19 = vector.shape_cast %16 : vector<64x8xbf16> to vector<1x64x8xbf16>
    tpu.vector_store %arg4[%c0_4, %c0_5, %c0_6], %19 {strides = array<i32>} : memref<1x64x8xbf16, #tpu.memory_space<vmem>>, vector<1x64x8xbf16>,
    %cst_7 = arith.constant dense<0.000000e+00> : vector<8xf32>
    %20 = vector.multi_reduction <add>, %15, %cst_7 [0] : vector<64x8xf32> to vector<8xf32>
    %21 = vector.shape_cast %20 : vector<8xf32> to vector<1x8xf32>
    %c0_8 = arith.constant 0 : index
    %c0_9 = arith.constant 0 : index
    %c0_10 = arith.constant 0 : index
    %c0_11 = arith.constant 0 : index
    %22 = vector.load %arg5[%c0_8, %c0_9, %c0_10, %c0_11] : memref<1x1x2x8xf32, #tpu.memory_space<vmem>>, vector<1x1x1x8xf32>
    %23 = vector.shape_cast %22 : vector<1x1x1x8xf32> to vector<1x8xf32>
    %24 = vector.shape_cast %21 : vector<1x8xf32> to vector<1x1x1x8xf32>
    tpu.vector_store %arg5[%c0_8, %c0_9, %c0_10, %c0_11], %24 {strides = array<i32>} : memref<1x1x2x8xf32, #tpu.memory_space<vmem>>, vector<1x1x1x8xf32>,
    %25 = arith.mulf %15, %15 : vector<64x8xf32>
    %cst_12 = arith.constant dense<0.000000e+00> : vector<8xf32>
    %26 = vector.multi_reduction <add>, %25, %cst_12 [0] : vector<64x8xf32> to vector<8xf32>
    %27 = vector.shape_cast %26 : vector<8xf32> to vector<1x8xf32>
    %c0_13 = arith.constant 0 : index
    %c0_14 = arith.constant 0 : index
    %c1 = arith.constant 1 : index
    %c0_15 = arith.constant 0 : index
    %28 = vector.load %arg5[%c0_13, %c0_14, %c1, %c0_15] : memref<1x1x2x8xf32, #tpu.memory_space<vmem>>, vector<1x1x1x8xf32>
    %29 = vector.shape_cast %28 : vector<1x1x1x8xf32> to vector<1x8xf32>
    %30 = vector.shape_cast %27 : vector<1x8xf32> to vector<1x1x1x8xf32>
    tpu.vector_store %arg5[%c0_13, %c0_14, %c1, %c0_15], %30 {strides = array<i32>} : memref<1x1x2x8xf32, #tpu.memory_space<vmem>>, vector<1x1x1x8xf32>,
    return
  }
  func.func @transform_0(%arg0: i32, %arg1: i32) -> (i32, i32, i32, i32) {
    %c0_i32 = arith.constant 0 : i32
    %c0_i32_0 = arith.constant 0 : i32
    %c0_i32_1 = arith.constant 0 : i32
    %c0_i32_2 = arith.constant 0 : i32
    return %arg0, %c0_i32, %c0_i32_0, %c0_i32_1 : i32, i32, i32, i32
  }
  func.func @transform_1(%arg0: i32, %arg1: i32) -> (i32, i32) {
    %c0_i32 = arith.constant 0 : i32
    %c0_i32_0 = arith.constant 0 : i32
    %c0_i32_1 = arith.constant 0 : i32
    return %c0_i32, %c0_i32_0 : i32, i32
  }
  func.func @transform_2(%arg0: i32, %arg1: i32) -> (i32, i32, i32) {
    %c0_i32 = arith.constant 0 : i32
    %c0_i32_0 = arith.constant 0 : i32
    return %arg0, %arg1, %c0_i32 : i32, i32, i32
  }
  func.func @transform_3(%arg0: i32, %arg1: i32) -> (i32, i32, i32, i32) {
    %c0_i32 = arith.constant 0 : i32
    %c0_i32_0 = arith.constant 0 : i32
    %c0_i32_1 = arith.constant 0 : i32
    return %arg0, %arg1, %c0_i32, %c0_i32_0 : i32, i32, i32, i32
  }
}

</mosaic_0001>

<llo_original>
// kernel: tile.13
$region0: #{tile.13}
  #allocation0 [shape = 's32[1]{0}', space=sflag, size = 0x4, scoped, tag = 'scoped memory for tile.13']
  %s0 = inlined_call_operand.vmem [shape: f32[8], index: 0, kind: input, shape index: {}]
  %s1 = inlined_call_operand.vmem [shape: f32[16,8], index: 1, kind: output, shape index: {}]
  // Predicated region
  $region2: #{tile.13} parent=0 // pred_check
    _
  $region3: #{tile.13} parent=0 // pred_check_branch
    %3 = sbr.rel (0) target = $region5
  $region4: #{tile.13} parent=0 // pred_region
    _
  $region5: #{tile.13} parent=0 // pred_fallthru
    _
  %v4 = vld [vmem:[%s0] ss:$0 sm:$0xff]
  %5 = vst [vmem:[%s1] sm:$0xff] %v4
  %s6 = scalar_lea.vmem %s1, 8
  %7 = vst [vmem:[%s6] sm:$0xff] %v4

// kernel: tile.14
$region0: #{tile.14}
  %s0 = inlined_call_operand.vmem [shape: f32[16,8], index: 0, kind: input, shape index: {}]
  %s1 = inlined_call_operand.vmem [shape: f32[1,128], index: 1, kind: output, shape index: {}]
  $region1: #{tile.14} parent=0
    #allocation0 [shape = 'u8[4096]{0}', space=vmem, size = 0x1000, scoped, tag = 'scoped mem for output reshape']
    %v2 = vld [vmem:[%s0] sm:$0x1]
    %vm3 = vcmask 64512
    %4 = vst.msk [vmem:[#allocation0] sm:$0x1] %vm3, %v2
    %s5 = scalar_lea.vmem %s0, 15
    %v6 = vld [vmem:[%s5] sm:$0x1]
    %7 = vrot.lane.b32.xlu0 %v6, 120
    %v8 = vpop.permute.xlu0 %7
    %vm9 = vcmask 1048512
    %10 = vst.msk [vmem:[#allocation0] sm:$0x1] %vm9, %v8
    %s11 = scalar_lea.vmem %s0, 14
    %v12 = vld [vmem:[%s11] sm:$0x1]
    %13 = vrot.lane.b32.xlu0 %v12, 112
    %v14 = vpop.permute.xlu0 %13
    %vm15 = vcmask 982912
    %16 = vst.msk [vmem:[#allocation0] sm:$0x1] %vm15, %v14
    %s17 = scalar_lea.vmem %s0, 13
    %v18 = vld [vmem:[%s17] sm:$0x1]
    %19 = vrot.lane.b32.xlu0 %v18, 104
    %v20 = vpop.permute.xlu0 %19
    %vm21 = vcmask 917312
    %22 = vst.msk [vmem:[#allocation0] sm:$0x1] %vm21, %v20
    %s23 = scalar_lea.vmem %s0, 12
    %v24 = vld [vmem:[%s23] sm:$0x1]
    %25 = vrot.lane.b32.xlu0 %v24, 96
    %v26 = vpop.permute.xlu0 %25
    %vm27 = vcmask 851712
    %28 = vst.msk [vmem:[#allocation0] sm:$0x1] %vm27, %v26
    %s29 = scalar_lea.vmem %s0, 11
    %v30 = vld [vmem:[%s29] sm:$0x1]
    %31 = vrot.lane.b32.xlu0 %v30, 88
    %v32 = vpop.permute.xlu0 %31
    %vm33 = vcmask 786112
    %34 = vst.msk [vmem:[#allocation0] sm:$0x1] %vm33, %v32
    %s35 = scalar_lea.vmem %s0, 10
    %v36 = vld [vmem:[%s35] sm:$0x1]
    %37 = vrot.lane.b32.xlu0 %v36, 80
    %v38 = vpop.permute.xlu0 %37
    %vm39 = vcmask 720512
    %40 = vst.msk [vmem:[#allocation0] sm:$0x1] %vm39, %v38
    %s41 = scalar_lea.vmem %s0, 9
    %v42 = vld [vmem:[%s41] sm:$0x1]
    %43 = vrot.lane.b32.xlu0 %v42, 72
    %v44 = vpop.permute.xlu0 %43
    %vm45 = vcmask 654912
    %46 = vst.msk [vmem:[#allocation0] sm:$0x1] %vm45, %v44
    %s47 = scalar_lea.vmem %s0, 8
    %v48 = vld [vmem:[%s47] sm:$0x1]
    %49 = vrot.lane.b32.xlu0 %v48, 64
    %v50 = vpop.permute.xlu0 %49
    %vm51 = vcmask 589312
    %52 = vst.msk [vmem:[#allocation0] sm:$0x1] %vm51, %v50
    %s53 = scalar_lea.vmem %s0, 7
    %v54 = vld [vmem:[%s53] sm:$0x1]
    %55 = vrot.lane.b32.xlu0 %v54, 56
    %v56 = vpop.permute.xlu0 %55
    %vm57 = vcmask 523712
    %58 = vst.msk [vmem:[#allocation0] sm:$0x1] %vm57, %v56
    %s59 = scalar_lea.vmem %s0, 6
    %v60 = vld [vmem:[%s59] sm:$0x1]
    %61 = vrot.lane.b32.xlu0 %v60, 48
    %v62 = vpop.permute.xlu0 %61
    %vm63 = vcmask 458112
    %64 = vst.msk [vmem:[#allocation0] sm:$0x1] %vm63, %v62
    %s65 = scalar_lea.vmem %s0, 5
    %v66 = vld [vmem:[%s65] sm:$0x1]
    %67 = vrot.lane.b32.xlu0 %v66, 40
    %v68 = vpop.permute.xlu0 %67
    %vm69 = vcmask 392512
    %70 = vst.msk [vmem:[#allocation0] sm:$0x1] %vm69, %v68
    %s71 = scalar_lea.vmem %s0, 4
    %v72 = vld [vmem:[%s71] sm:$0x1]
    %73 = vrot.lane.b32.xlu0 %v72, 32
    %v74 = vpop.permute.xlu0 %73
    %vm75 = vcmask 326912
    %76 = vst.msk [vmem:[#allocation0] sm:$0x1] %vm75, %v74
    %s77 = scalar_lea.vmem %s0, 3
    %v78 = vld [vmem:[%s77] sm:$0x1]
    %79 = vrot.lane.b32.xlu0 %v78, 24
    %v80 = vpop.permute.xlu0 %79
    %vm81 = vcmask 261312
    %82 = vst.msk [vmem:[#allocation0] sm:$0x1] %vm81, %v80
    %s83 = scalar_lea.vmem %s0, 2
    %v84 = vld [vmem:[%s83] sm:$0x1]
    %85 = vrot.lane.b32.xlu0 %v84, 16
    %v86 = vpop.permute.xlu0 %85
    %vm87 = vcmask 195712
    %88 = vst.msk [vmem:[#allocation0] sm:$0x1] %vm87, %v86
    %s89 = scalar_lea.vmem %s0, 1
    %v90 = vld [vmem:[%s89] sm:$0x1]
    %91 = vrot.lane.b32.xlu0 %v90, 8
    %v92 = vpop.permute.xlu0 %91
    %vm93 = vcmask 130112
    %94 = vst.msk [vmem:[#allocation0] sm:$0x1] %vm93, %v92
    %s96 = ssub.s32 2, 1
    %v97 = vld [vmem:[#allocation0] sm:%s96]
    %s99 = ssub.s32 2, 1
    %100 = vst [vmem:[%s1] sm:%s99] %v97

// kernel: unet_down_forward.3
$region0: #{unet_down_forward.3}
  #allocation0 [shape = 'u32[]', space=smem, size = 0x4, offset = 0x4, fixed_abs, tag = 'smem constant byte address 0x4 - core index']
  #allocation1 [shape = 'u32[72,128]{1,0:T(1,128)}', space=vmem, size = 0x9000, scoped, tag = 'internal scratch']
  %s0 = inlined_call_operand.vmem [shape: bf16[8,128], index: 0, kind: input, shape index: {}]
  %s1 = inlined_call_operand.vmem [shape: f32[1,128], index: 1, kind: input, shape index: {}]
  %s2 = inlined_call_operand.vmem [shape: f32[1,128], index: 2, kind: input, shape index: {}]
  %s3 = inlined_call_operand.vmem [shape: f32[8,128], index: 3, kind: output, shape index: {}]
  %s4 = sld [smem:[#allocation0]]
  $region22: #{unet_down_forward.3} parent=0
    _
  %s6 = ssub.s32 1, %s4
  %s7 = scalar_select 0, %s6, %s4
  // Predicated region
  $region2: #{unet_down_forward.3} parent=0 // pred_check
    _
  $region3: #{unet_down_forward.3} parent=0 // pred_check_branch
    %9 = sbr.rel (0) target = $region5
  $region4: #{unet_down_forward.3} parent=0 // pred_region
    _
  $region5: #{unet_down_forward.3} parent=0 // pred_fallthru
    _
  // Predicated region
  $region6: #{unet_down_forward.3} parent=0 // pred_check
    _
  $region7: #{unet_down_forward.3} parent=0 // pred_check_branch
    %11 = sbr.rel (0) target = $region9
  $region8: #{unet_down_forward.3} parent=0 // pred_region
    _
  $region9: #{unet_down_forward.3} parent=0 // pred_fallthru
    _
  // Predicated region
  $region10: #{unet_down_forward.3} parent=0 // pred_check
    _
  $region11: #{unet_down_forward.3} parent=0 // pred_check_branch
    %13 = sbr.rel (0) target = $region13
  $region12: #{unet_down_forward.3} parent=0 // pred_region
    _
  $region13: #{unet_down_forward.3} parent=0 // pred_fallthru
    _
  %v14 = vld [vmem:[%s0] sm:$0xf]
  %v15 = vunpack.c.l.bf16 %v14
  %v16 = vld [vmem:[%s1] sm:$0x1]
  %v18 = vperm.slane %v16, 0
  %v20 = vmul.f32 %v15, %v18
  %v21 = vld [vmem:[%s2] sm:$0x1]
  %v23 = vperm.slane %v21, 0
  %v25 = vadd.f32 %v20, %v23
  %vm26 = vcmp.ge.f32.partialorder %v25, 0.0
  %v27 = vmul.f32 %v25, 0.2
  %v28 = vsel %vm26, %v25, %v27
  %29 = vst [vmem:[%s3] sm:$0xff] %v28
  // Predicated region
  $region14: #{unet_down_forward.3} parent=0 // pred_check
    _
  $region15: #{unet_down_forward.3} parent=0 // pred_check_branch
    %31 = sbr.rel (0) target = $region17
  $region16: #{unet_down_forward.3} parent=0 // pred_region
    _
  $region17: #{unet_down_forward.3} parent=0 // pred_fallthru
    _
  // Predicated region
  $region18: #{unet_down_forward.3} parent=0 // pred_check
    _
  $region19: #{unet_down_forward.3} parent=0 // pred_check_branch
    %33 = sbr.rel (0) target = $region21
  $region20: #{unet_down_forward.3} parent=0 // pred_region
    _
  $region21: #{unet_down_forward.3} parent=0 // pred_fallthru
    _

// kernel: unet_down_forward.2
$region0: #{unet_down_forward.2}
  #allocation0 [shape = 'u32[]', space=smem, size = 0x4, offset = 0x4, fixed_abs, tag = 'smem constant byte address 0x4 - core index']
  #allocation1 [shape = 'u32[72,128]{1,0:T(1,128)}', space=vmem, size = 0x9000, scoped, tag = 'internal scratch']
  %s0 = inlined_call_operand.vmem [shape: bf16[2,9,9,16], index: 0, kind: input, shape index: {}]
  %s1 = inlined_call_operand.vmem [shape: bf16[64,8], index: 1, kind: input, shape index: {}]
  %s2 = inlined_call_operand.vmem [shape: bf16[2,64,8], index: 2, kind: output, shape index: {0}]
  %s3 = inlined_call_operand.vmem [shape: f32[2,1,2,8], index: 3, kind: output, shape index: {1}]
  %4 = xla_tuple %s2, %s3
  %s5 = sld [smem:[#allocation0]]
  $region49: #{unet_down_forward.2} parent=0
    _
  %s7 = ssub.s32 1, %s5
  %s8 = scalar_select 0, %s7, %s5
  loop: start=0, step=1, limit=4
  $region2: #{unet_down_forward.2} parent=0 // loop_pre_header
    _
  $region3: #{unet_down_forward.2} parent=0 // loop_header
    %s10 = sphi 0, %s14
    %p11 = scmp.ge.s32.totalorder %s10, 4
    %s17 = sphi 0, %s29
    %s18 = sphi 0, %s25
    %s19 = sphi 0, %s17
    %s20 = sphi 0, %s18
    %s21 = sphi 0, %s19
    %s22 = sphi 0, %s20
    %s32 = sphi 0, %s34
    %s35 = sphi 0, %s32
    %s36 = sphi 0, %s35
    %s52 = sphi 0, %s36
    %s56 = sphi 0, %s56
    %s58 = sphi 0, %s56
    %s59 = sphi 0, %s58
    %s73 = sphi 0, %s59
    %s81 = sphi 0, %s83
    %s84 = sphi 0, %s81
    %s85 = sphi 0, %s84
    %s101 = sphi 0, %s85
    %s109 = sphi 0, %s111
    %s112 = sphi 0, %s109
    %s113 = sphi 0, %s112
    %s129 = sphi 0, %s113
  $region4: #{unet_down_forward.2} parent=0 // loop_header_branch
    %13 = sbr.rel (%p11) target = $region8
  $region5: #{unet_down_forward.2} parent=0 // loop_body
    %s15 = ssub.s32 %s10, 1
    %s16 = ssub.s32 %s10, 2
    %s23 = sadd.s32 1, %s18
    %p24 = scmp.ge.s32.totalorder %s23, 1
    %s25 = scalar_select %p24, 0, %s23
    %s26 = sadd.s32 1, %s17
    %s27 = scalar_select %p24, %s26, %s17
    %p28 = scmp.ge.s32.totalorder %s27, 2
    %s29 = scalar_select %p28, 0, %s27
    %s30 = ssub.s32 %s17, %s29
    %p31 = scmp.eq.s32.totalorder %s30, 0
    %s33 = sadd.s32 %s32, 1
    %s34 = scalar_select %p31, %s32, %s33
    %p37 = pneg %p31
    %p38 = scmp.eq.s32.totalorder %s10, 1
    %p39 = por %p37, %p38
    %p40 = scmp.ne.s32.totalorder %s32, %s35
    %p41 = scmp.eq.s32.totalorder %s10, 0
    %p42 = por %p40, %p41
    %p43 = scmp.ne.s32.totalorder %s32, %s35
    %p44 = scmp.eq.s32.totalorder %s15, 1
    %p45 = por %p43, %p44
    %p46 = scmp.ne.s32.totalorder %s35, %s36
    %p47 = scmp.eq.s32.totalorder %s15, 0
    %p48 = por %p46, %p47
    %p49 = scmp.ne.s32.totalorder %s35, %s36
    %p50 = scmp.eq.s32.totalorder %s16, 1
    %p51 = por %p49, %p50
    %p53 = scmp.ne.s32.totalorder %s36, %s52
    %p54 = scmp.eq.s32.totalorder %s16, 0
    %p55 = por %p53, %p54
    %s57 = sadd.s32 %s56, 1
    %p60 = scmp.eq.s32.totalorder %s10, 1
    %p61 = scmp.ne.s32.totalorder %s56, %s58
    %p62 = scmp.eq.s32.totalorder %s10, 0
    %p63 = por %p61, %p62
    %p64 = scmp.ne.s32.totalorder %s56, %s58
    %p65 = scmp.eq.s32.totalorder %s15, 1
    %p66 = por %p64, %p65
    %p67 = scmp.ne.s32.totalorder %s58, %s59
    %p68 = scmp.eq.s32.totalorder %s15, 0
    %p69 = por %p67, %p68
    %p70 = scmp.ne.s32.totalorder %s58, %s59
    %p71 = scmp.eq.s32.totalorder %s16, 1
    %p72 = por %p70, %p71
    %p74 = scmp.ne.s32.totalorder %s59, %s73
    %p75 = scmp.eq.s32.totalorder %s16, 0
    %p76 = por %p74, %p75
    %s77 = ssub.s32 %s17, %s29
    %s78 = ssub.s32 %s18, %s25
    %s79 = sor.u32 %s77, %s78
    %p80 = scmp.eq.s32.totalorder %s79, 0
    %s82 = sadd.s32 %s81, 1
    %s83 = scalar_select %p80, %s81, %s82
    %p86 = pneg %p80
    %p87 = scmp.eq.s32.totalorder %s10, 1
    %p88 = por %p86, %p87
    %p89 = scmp.ne.s32.totalorder %s81, %s84
    %p90 = scmp.eq.s32.totalorder %s10, 0
    %p91 = por %p89, %p90
    %p92 = scmp.ne.s32.totalorder %s81, %s84
    %p93 = scmp.eq.s32.totalorder %s15, 1
    %p94 = por %p92, %p93
    %p95 = scmp.ne.s32.totalorder %s84, %s85
    %p96 = scmp.eq.s32.totalorder %s15, 0
    %p97 = por %p95, %p96
    %p98 = scmp.ne.s32.totalorder %s84, %s85
    %p99 = scmp.eq.s32.totalorder %s16, 1
    %p100 = por %p98, %p99
    %p102 = scmp.ne.s32.totalorder %s85, %s101
    %p103 = scmp.eq.s32.totalorder %s16, 0
    %p104 = por %p102, %p103
    %s105 = ssub.s32 %s17, %s29
    %s106 = ssub.s32 %s18, %s25
    %s107 = sor.u32 %s105, %s106
    %p108 = scmp.eq.s32.totalorder %s107, 0
    %s110 = sadd.s32 %s109, 1
    %s111 = scalar_select %p108, %s109, %s110
    %p114 = pneg %p108
    %p115 = scmp.eq.s32.totalorder %s10, 1
    %p116 = por %p114, %p115
    %p117 = scmp.ne.s32.totalorder %s109, %s112
    %p118 = scmp.eq.s32.totalorder %s10, 0
    %p119 = por %p117, %p118
    %p120 = scmp.ne.s32.totalorder %s109, %s112
    %p121 = scmp.eq.s32.totalorder %s15, 1
    %p122 = por %p120, %p121
    %p123 = scmp.ne.s32.totalorder %s112, %s113
    %p124 = scmp.eq.s32.totalorder %s15, 0
    %p125 = por %p123, %p124
    %p126 = scmp.ne.s32.totalorder %s112, %s113
    %p127 = scmp.eq.s32.totalorder %s16, 1
    %p128 = por %p126, %p127
    %p130 = scmp.ne.s32.totalorder %s113, %s129
    %p131 = scmp.eq.s32.totalorder %s16, 0
    %p132 = por %p130, %p131
    %p133 = scmp.le.s32.totalorder 1, %s10
    %p134 = scmp.lt.s32.totalorder %s10, 3
    %p135 = pnand %p133, %p134
    %p136 = pneg %p135
    // Predicated region
    $region9: #{unet_down_forward.2} parent=5 // pred_check
      _
    $region10: #{unet_down_forward.2} parent=5 // pred_check_branch
      %138 = sbr.rel (%p135) target = $region12
    $region11: #{unet_down_forward.2} parent=5 // pred_region
      %s139 = ssub.s32 %s10, 1
      // Predicated region
      $region13: #{unet_down_forward.2} parent=11 // pred_check
        %p140 = pneg %p69
      $region14: #{unet_down_forward.2} parent=11 // pred_check_branch
        %142 = sbr.rel (%p140) target = $region16
      $region15: #{unet_down_forward.2} parent=11 // pred_region
        _
      $region16: #{unet_down_forward.2} parent=11 // pred_fallthru
        _
    $region12: #{unet_down_forward.2} parent=5 // pred_fallthru
      _
    %p143 = scmp.lt.s32.totalorder %s10, 2
    // Predicated region
    $region17: #{unet_down_forward.2} parent=5 // pred_check
      %p144 = pneg %p143
    $region18: #{unet_down_forward.2} parent=5 // pred_check_branch
      %146 = sbr.rel (%p144) target = $region20
    $region19: #{unet_down_forward.2} parent=5 // pred_region
      // Predicated region
      $region21: #{unet_down_forward.2} parent=19 // pred_check
        %p147 = pneg %p42
      $region22: #{unet_down_forward.2} parent=19 // pred_check_branch
        %149 = sbr.rel (%p147) target = $region24
      $region23: #{unet_down_forward.2} parent=19 // pred_region
        %p150 = scmp.lt.s32.totalorder %s17, 1
        %s151 = scalar_select %p150, %s17, 1
        %s152 = smul.addr %s151, 18
        %s153 = smul.addr %s152, 4
        %s154 = scalar_lea.vmem %s0, %s153
      $region24: #{unet_down_forward.2} parent=19 // pred_fallthru
        _
    $region20: #{unet_down_forward.2} parent=5 // pred_fallthru
      _
    %p155 = scmp.le.s32.totalorder 1, %s10
    %p156 = scmp.lt.s32.totalorder %s10, 3
    %p157 = pnand %p155, %p156
    %p158 = pneg %p157
    // Predicated region
    $region25: #{unet_down_forward.2} parent=5 // pred_check
      _
    $region26: #{unet_down_forward.2} parent=5 // pred_check_branch
      %160 = sbr.rel (%p157) target = $region28
    $region27: #{unet_down_forward.2} parent=5 // pred_region
      %s161 = ssub.s32 %s10, 1
      %p162 = scmp.lt.s32.totalorder %s19, 1
      %s163 = scalar_select %p162, %s19, 1
      %s164 = smul.addr %s163, 18
      %s165 = smul.addr %s164, 4
      %s166 = scalar_lea.vmem %s0, %s165
      %p167 = pneg %p48
      %p168 = pneg %p45
      %p169 = pneg %p69
      %p170 = pneg %p66
      %p171 = pneg %p97
      %p172 = pneg %p94
      %s173 = smul.u32 8, %s20
      %p174 = scmp.lt.s32.totalorder %s19, 1
      %s175 = scalar_select %p174, %s19, 1
      %p176 = scmp.lt.s32.totalorder %s173, 7
      %s177 = scalar_select %p176, %s173, 7
      %s178 = smul.addr %s175, 8
      %s179 = sadd.s32 %s177, %s178
      %s180 = smul.addr %s179, 4
      %s181 = scalar_lea.vmem %s2, %s180
      %p182 = pneg %p125
      %p183 = pneg %p122
      %p184 = scmp.lt.s32.totalorder %s19, 1
      %s185 = scalar_select %p184, %s19, 1
      %p186 = scmp.lt.s32.totalorder %s20, 0
      %s187 = scalar_select %p186, %s20, 0
      %s188 = sadd.s32 %s187, %s185
      %s189 = smul.addr %s188, 2
      %s190 = scalar_lea.vmem %s3, %s189
      %p191 = scmp.lt.s32.totalorder %s19, 1
      %s192 = scalar_select %p191, %s19, 1
      %s193 = smul.addr %s192, 18
      %s194 = smul.addr %s193, 4
      %s195 = scalar_lea.vmem %s0, %s194
      %s196 = smul.u32 8, %s20
      %p197 = scmp.lt.s32.totalorder %s19, 1
      %s198 = scalar_select %p197, %s19, 1
      %p199 = scmp.lt.s32.totalorder %s196, 7
      %s200 = scalar_select %p199, %s196, 7
      %s201 = smul.addr %s198, 8
      %s202 = sadd.s32 %s200, %s201
      %s203 = smul.addr %s202, 4
      %s204 = scalar_lea.vmem %s2, %s203
      %s205 = smul.u32 8, %s20
      %p206 = scmp.lt.s32.totalorder %s19, 1
      %s207 = scalar_select %p206, %s19, 1
      %p208 = scmp.lt.s32.totalorder %s20, 0
      %s209 = scalar_select %p208, %s20, 0
      %s210 = sadd.s32 %s209, %s207
      %s211 = smul.addr %s210, 2
      %s212 = scalar_lea.vmem %s3, %s211
      %s214 = smul.u32 %s20, 8
      %s215 = smul.u32 %s214, 2
      %s216 = smul.addr %s215, 4
      %s217 = scalar_lea.vmem %s195, %s216
      %v218 = vld [vmem:[%s217] sm:$0xf]
      %v219 = vld [vmem:[%s217 + $0x4] sm:$0x1]
      %v220 = vld [vmem:[%s217 + $0x8] sm:$0xf]
      %v221 = vld [vmem:[%s217 + $0xc] sm:$0x1]
      %v222 = vld [vmem:[%s217 + $0x10] sm:$0xf]
      %v223 = vld [vmem:[%s217 + $0x14] sm:$0x1]
      %v224 = vld [vmem:[%s217 + $0x18] sm:$0xf]
      %v225 = vld [vmem:[%s217 + $0x1c] sm:$0x1]
      %v226 = vld [vmem:[%s217 + $0x20] sm:$0xf]
      %v227 = vld [vmem:[%s217 + $0x24] sm:$0x1]
      %v228 = vld [vmem:[%s217 + $0x28] sm:$0xf]
      %v229 = vld [vmem:[%s217 + $0x2c] sm:$0x1]
      %v230 = vld [vmem:[%s217 + $0x30] sm:$0xf]
      %v231 = vld [vmem:[%s217 + $0x34] sm:$0x1]
      %v232 = vld [vmem:[%s217 + $0x38] sm:$0xf]
      %v233 = vld [vmem:[%s217 + $0x3c] sm:$0x1]
      %v234 = vld [vmem:[%s217 + $0x40] sm:$0xf]
      %v235 = vld [vmem:[%s217 + $0x44] sm:$0x1]
      %vm236 = vsmask.f32 3328
      %vm237 = vsmask.f32 7440
      %vm238 = vmor %vm236, %vm237
      %v240 = vshrl.u32 %v218, 16
      %v242 = vrot.slane %v240, 4
      %v243 = vshll.u32 %v218, 16
      %v245 = vrot.slane %v243, 5
      %v246 = vor.u32 %v242, %v245
      %v247 = vrot.slane %v246, 4
      %v249 = vshll.u32 %v219, 16
      %v251 = vrot.slane %v249, 5
      %v252 = vsel %vm238, %v247, %v251
      %v254 = vshrl.u32 %v220, 16
      %v256 = vrot.slane %v254, 4
      %v257 = vshll.u32 %v220, 16
      %v259 = vrot.slane %v257, 5
      %v260 = vor.u32 %v256, %v259
      %v261 = vrot.slane %v260, 4
      %v263 = vshll.u32 %v221, 16
      %v265 = vrot.slane %v263, 5
      %v266 = vsel %vm238, %v261, %v265
      %v268 = vshrl.u32 %v222, 16
      %v270 = vrot.slane %v268, 4
      %v271 = vshll.u32 %v222, 16
      %v273 = vrot.slane %v271, 5
      %v274 = vor.u32 %v270, %v273
      %v275 = vrot.slane %v274, 4
      %v277 = vshll.u32 %v223, 16
      %v279 = vrot.slane %v277, 5
      %v280 = vsel %vm238, %v275, %v279
      %v282 = vshrl.u32 %v224, 16
      %v284 = vrot.slane %v282, 4
      %v285 = vshll.u32 %v224, 16
      %v287 = vrot.slane %v285, 5
      %v288 = vor.u32 %v284, %v287
      %v289 = vrot.slane %v288, 4
      %v291 = vshll.u32 %v225, 16
      %v293 = vrot.slane %v291, 5
      %v294 = vsel %vm238, %v289, %v293
      %v296 = vshrl.u32 %v226, 16
      %v298 = vrot.slane %v296, 4
      %v299 = vshll.u32 %v226, 16
      %v301 = vrot.slane %v299, 5
      %v302 = vor.u32 %v298, %v301
      %v303 = vrot.slane %v302, 4
      %v305 = vshll.u32 %v227, 16
      %v307 = vrot.slane %v305, 5
      %v308 = vsel %vm238, %v303, %v307
      %v310 = vshrl.u32 %v228, 16
      %v312 = vrot.slane %v310, 4
      %v313 = vshll.u32 %v228, 16
      %v315 = vrot.slane %v313, 5
      %v316 = vor.u32 %v312, %v315
      %v317 = vrot.slane %v316, 4
      %v319 = vshll.u32 %v229, 16
      %v321 = vrot.slane %v319, 5
      %v322 = vsel %vm238, %v317, %v321
      %v324 = vshrl.u32 %v230, 16
      %v326 = vrot.slane %v324, 4
      %v327 = vshll.u32 %v230, 16
      %v329 = vrot.slane %v327, 5
      %v330 = vor.u32 %v326, %v329
      %v331 = vrot.slane %v330, 4
      %v333 = vshll.u32 %v231, 16
      %v335 = vrot.slane %v333, 5
      %v336 = vsel %vm238, %v331, %v335
      %v338 = vshrl.u32 %v232, 16
      %v340 = vrot.slane %v338, 4
      %v341 = vshll.u32 %v232, 16
      %v343 = vrot.slane %v341, 5
      %v344 = vor.u32 %v340, %v343
      %v345 = vrot.slane %v344, 4
      %v347 = vshll.u32 %v233, 16
      %v349 = vrot.slane %v347, 5
      %v350 = vsel %vm238, %v345, %v349
      %v352 = vshrl.u32 %v234, 16
      %v354 = vrot.slane %v352, 4
      %v355 = vshll.u32 %v234, 16
      %v357 = vrot.slane %v355, 5
      %v358 = vor.u32 %v354, %v357
      %v359 = vrot.slane %v358, 4
      %v361 = vshll.u32 %v235, 16
      %v363 = vrot.slane %v361, 5
      %v364 = vsel %vm238, %v359, %v363
      %v373 = vunpack.c.l.b16 %v218
      %v374 = vunpack.c.l.b16 %v220
      %v375 = vunpack.c.l.b16 %v222
      %v376 = vunpack.c.l.b16 %v224
      %v377 = vunpack.c.l.b16 %v226
      %v378 = vunpack.c.l.b16 %v228
      %v379 = vunpack.c.l.b16 %v230
      %v380 = vunpack.c.l.b16 %v232
      %v381 = vpack.c.b16 %v374, %v373
      %v382 = vpack.c.b16 %v376, %v375
      %v383 = vpack.c.b16 %v378, %v377
      %v384 = vpack.c.b16 %v380, %v379
      %v385 = vunpack.c.l.b16 %v252
      %v386 = vunpack.c.l.b16 %v266
      %v387 = vunpack.c.l.b16 %v280
      %v388 = vunpack.c.l.b16 %v294
      %v389 = vunpack.c.l.b16 %v308
      %v390 = vunpack.c.l.b16 %v322
      %v391 = vunpack.c.l.b16 %v336
      %v392 = vunpack.c.l.b16 %v350
      %v393 = vpack.c.b16 %v386, %v385
      %v394 = vpack.c.b16 %v388, %v387
      %v395 = vpack.c.b16 %v390, %v389
      %v396 = vpack.c.b16 %v392, %v391
      %397 = vrot.lane.b32.xlu0 %v393, 16
      %v398 = vpop.permute.xlu0 %397
      %399 = vrot.lane.b32.xlu0 %v394, 16
      %v400 = vpop.permute.xlu0 %399
      %401 = vrot.lane.b32.xlu0 %v395, 16
      %v402 = vpop.permute.xlu0 %401
      %403 = vrot.lane.b32.xlu0 %v396, 16
      %v404 = vpop.permute.xlu0 %403
      %v406 = vunpack.c.l.b16 %v234
      %v407 = vpack.c.b16 %v375, %v374
      %v408 = vpack.c.b16 %v377, %v376
      %v409 = vpack.c.b16 %v379, %v378
      %v410 = vpack.c.b16 %v406, %v380
      %411 = vrot.lane.b32.xlu0 %v407, 32
      %v412 = vpop.permute.xlu0 %411
      %413 = vrot.lane.b32.xlu0 %v408, 32
      %v414 = vpop.permute.xlu0 %413
      %415 = vrot.lane.b32.xlu0 %v409, 32
      %v416 = vpop.permute.xlu0 %415
      %417 = vrot.lane.b32.xlu0 %v410, 32
      %v418 = vpop.permute.xlu0 %417
      %v419 = vunpack.c.l.b16 %v364
      %v420 = vpack.c.b16 %v387, %v386
      %v421 = vpack.c.b16 %v389, %v388
      %v422 = vpack.c.b16 %v391, %v390
      %v423 = vpack.c.b16 %v419, %v392
      %424 = vrot.lane.b32.xlu0 %v420, 48
      %v425 = vpop.permute.xlu0 %424
      %426 = vrot.lane.b32.xlu0 %v421, 48
      %v427 = vpop.permute.xlu0 %426
      %428 = vrot.lane.b32.xlu0 %v422, 48
      %v429 = vpop.permute.xlu0 %428
      %430 = vrot.lane.b32.xlu0 %v423, 48
      %v431 = vpop.permute.xlu0 %430
      %vm432 = vcmask 130048
      %v435 = vsel %vm432, %v381, %v398
      %v438 = vsel %vm432, %v382, %v400
      %v441 = vsel %vm432, %v383, %v402
      %v444 = vsel %vm432, %v384, %v404
      %vm445 = vcmask 261120
      %v447 = vsel %vm445, %v435, %v412
      %v449 = vsel %vm445, %v438, %v414
      %v451 = vsel %vm445, %v441, %v416
      %v453 = vsel %vm445, %v444, %v418
      %vm454 = vcmask 392192
      %v456 = vsel %vm454, %v447, %v425
      %v458 = vsel %vm454, %v449, %v427
      %v460 = vsel %vm454, %v451, %v429
      %v462 = vsel %vm454, %v453, %v431
      %v463 = vld [vmem:[%s1] sm:$0xf]
      %v464 = vld [vmem:[%s1 + $0x4] sm:$0xf]
      %v465 = vld [vmem:[%s1 + $0x8] sm:$0xf]
      %v466 = vld [vmem:[%s1 + $0xc] sm:$0xf]
      %v467 = vld [vmem:[%s1 + $0x10] sm:$0xf]
      %v468 = vld [vmem:[%s1 + $0x14] sm:$0xf]
      %v469 = vld [vmem:[%s1 + $0x18] sm:$0xf]
      %v470 = vld [vmem:[%s1 + $0x1c] sm:$0xf]
      %v479 = vunpack.c.l.b16 %v463
      %v480 = vunpack.c.l.b16 %v464
      %v481 = vunpack.c.l.b16 %v465
      %v482 = vunpack.c.l.b16 %v466
      %v483 = vunpack.c.l.b16 %v467
      %v484 = vunpack.c.l.b16 %v468
      %v485 = vunpack.c.l.b16 %v469
      %v486 = vunpack.c.l.b16 %v470
      %v487 = vpack.c.b16 %v480, %v479
      %v488 = vpack.c.b16 %v482, %v481
      %v489 = vpack.c.b16 %v484, %v483
      %v490 = vpack.c.b16 %v486, %v485
      %vm495 = vcmask 523264
      %v496 = vsel %vm495, %v456, 0
      %v498 = vsel %vm495, %v458, 0
      %v500 = vsel %vm495, %v460, 0
      %v502 = vsel %vm495, %v462, 0
      %504 = vmatpush.bf16.msra.mxu0 0
      %505 = vmatpush.bf16.msra.mxu0 0
      %506 = vmatpush.bf16.msra.mxu0 0
      %507 = vmatpush.bf16.msra.mxu0 0
      %508 = vmatpush.bf16.msra.mxu0 %v490
      %509 = vmatpush.bf16.msra.mxu0 %v489
      %510 = vmatpush.bf16.msra.mxu0 %v488
      %511 = vmatpush.bf16.msra.mxu0 %v487
      %512 = vmatmul.bf16.gmra.mxu0 %v496
      %v513 = vpop.f32.mrf.mxu0
      %v514 = vadd.f32 0.0, %v513
      %v515 = vpop.f32.mrf.mxu0
      %v516 = vadd.f32 0.0, %v515
      %517 = vmatmul.bf16.gmra.mxu0 %v498
      %v518 = vpop.f32.mrf.mxu0
      %v519 = vadd.f32 0.0, %v518
      %v520 = vpop.f32.mrf.mxu0
      %v521 = vadd.f32 0.0, %v520
      %522 = vmatmul.bf16.gmra.mxu0 %v500
      %v523 = vpop.f32.mrf.mxu0
      %v524 = vadd.f32 0.0, %v523
      %v525 = vpop.f32.mrf.mxu0
      %v526 = vadd.f32 0.0, %v525
      %527 = vmatmul.bf16.gmra.mxu0 %v502
      %v528 = vpop.f32.mrf.mxu0
      %v529 = vadd.f32 0.0, %v528
      %v530 = vpop.f32.mrf.mxu0
      %v531 = vadd.f32 0.0, %v530
      %532 = vdwg.mxu0
      %v533 = vpack.c.bf16 %v514, %v514
      %v534 = vpack.c.bf16 %v516, %v516
      %v535 = vpack.c.bf16 %v519, %v519
      %v536 = vpack.c.bf16 %v521, %v521
      %v537 = vpack.c.bf16 %v524, %v524
      %v538 = vpack.c.bf16 %v526, %v526
      %v539 = vpack.c.bf16 %v529, %v529
      %v540 = vpack.c.bf16 %v531, %v531
      %vm541 = vcmask 60416
      %542 = vst.msk [vmem:[%s204] sm:$0xf] %vm541, %v533
      %543 = vst.msk [vmem:[%s204 + $0x4] sm:$0xf] %vm541, %v534
      %544 = vst.msk [vmem:[%s204 + $0x8] sm:$0xf] %vm541, %v535
      %545 = vst.msk [vmem:[%s204 + $0xc] sm:$0xf] %vm541, %v536
      %546 = vst.msk [vmem:[%s204 + $0x10] sm:$0xf] %vm541, %v537
      %547 = vst.msk [vmem:[%s204 + $0x14] sm:$0xf] %vm541, %v538
      %548 = vst.msk [vmem:[%s204 + $0x18] sm:$0xf] %vm541, %v539
      %549 = vst.msk [vmem:[%s204 + $0x1c] sm:$0xf] %vm541, %v540
      %vm550 = vcmask 64512
      %v551 = vsel %vm550, %v514, 0.0
      %v552 = vsel %vm550, %v516, 0.0
      %v553 = vadd.f32 %v551, %v552
      %v554 = vsel %vm550, %v519, 0.0
      %v555 = vadd.f32 %v553, %v554
      %v556 = vsel %vm550, %v521, 0.0
      %v557 = vadd.f32 %v555, %v556
      %v558 = vsel %vm550, %v524, 0.0
      %v559 = vadd.f32 %v557, %v558
      %v560 = vsel %vm550, %v526, 0.0
      %v561 = vadd.f32 %v559, %v560
      %v562 = vsel %vm550, %v529, 0.0
      %v563 = vadd.f32 %v561, %v562
      %v564 = vsel %vm550, %v531, 0.0
      %v565 = vadd.f32 %v563, %v564
      %v566 = vrot.slane %v565, 4
      %v567 = vadd.f32 %v565, %v566
      %v568 = vrot.slane %v567, 2
      %v569 = vadd.f32 %v567, %v568
      %v570 = vrot.slane %v569, 1
      %v571 = vadd.f32 %v569, %v570
      %vm572 = vcmask 57344
      %573 = vst.msk [vmem:[%s212] sm:$0x1] %vm572, %v571
      %v574 = vmul.f32 %v514, %v514
      %v575 = vmul.f32 %v516, %v516
      %v576 = vmul.f32 %v519, %v519
      %v577 = vmul.f32 %v521, %v521
      %v578 = vmul.f32 %v524, %v524
      %v579 = vmul.f32 %v526, %v526
      %v580 = vmul.f32 %v529, %v529
      %v581 = vmul.f32 %v531, %v531
      %v582 = vsel %vm550, %v574, 0.0
      %v583 = vsel %vm550, %v575, 0.0
      %v584 = vadd.f32 %v582, %v583
      %v585 = vsel %vm550, %v576, 0.0
      %v586 = vadd.f32 %v584, %v585
      %v587 = vsel %vm550, %v577, 0.0
      %v588 = vadd.f32 %v586, %v587
      %v589 = vsel %vm550, %v578, 0.0
      %v590 = vadd.f32 %v588, %v589
      %v591 = vsel %vm550, %v579, 0.0
      %v592 = vadd.f32 %v590, %v591
      %v593 = vsel %vm550, %v580, 0.0
      %v594 = vadd.f32 %v592, %v593
      %v595 = vsel %vm550, %v581, 0.0
      %v596 = vadd.f32 %v594, %v595
      %v597 = vrot.slane %v596, 4
      %v598 = vadd.f32 %v596, %v597
      %v599 = vrot.slane %v598, 2
      %v600 = vadd.f32 %v598, %v599
      %v601 = vrot.slane %v600, 1
      %v602 = vadd.f32 %v600, %v601
      %603 = vst.msk [vmem:[%s212 + $0x1] sm:$0x1] %vm572, %v602
      %s604 = smul.u32 8, %s20
      %p605 = scmp.lt.s32.totalorder %s19, 1
      %s606 = scalar_select %p605, %s19, 1
      %p607 = scmp.lt.s32.totalorder %s604, 7
      %s608 = scalar_select %p607, %s604, 7
      %s609 = smul.addr %s606, 8
      %s610 = sadd.s32 %s608, %s609
      %s611 = smul.addr %s610, 4
      %s612 = scalar_lea.vmem %s2, %s611
      %p613 = scmp.lt.s32.totalorder %s19, 1
      %s614 = scalar_select %p613, %s19, 1
      %p615 = scmp.lt.s32.totalorder %s20, 0
      %s616 = scalar_select %p615, %s20, 0
      %s617 = sadd.s32 %s616, %s614
      %s618 = smul.addr %s617, 2
      %s619 = scalar_lea.vmem %s3, %s618
      // Predicated region
      $region29: #{unet_down_forward.2} parent=27 // pred_check
        %p620 = pneg %p94
      $region30: #{unet_down_forward.2} parent=27 // pred_check_branch
        %622 = sbr.rel (%p620) target = $region32
      $region31: #{unet_down_forward.2} parent=27 // pred_region
        %s623 = smul.u32 8, %s20
      $region32: #{unet_down_forward.2} parent=27 // pred_fallthru
        _
      // Predicated region
      $region33: #{unet_down_forward.2} parent=27 // pred_check
        %p624 = pneg %p122
      $region34: #{unet_down_forward.2} parent=27 // pred_check_branch
        %626 = sbr.rel (%p624) target = $region36
      $region35: #{unet_down_forward.2} parent=27 // pred_region
        _
      $region36: #{unet_down_forward.2} parent=27 // pred_fallthru
        _
    $region28: #{unet_down_forward.2} parent=5 // pred_fallthru
      _
    %p627 = scmp.le.s32.totalorder 2, %s10
    // Predicated region
    $region37: #{unet_down_forward.2} parent=5 // pred_check
      %p628 = pneg %p627
    $region38: #{unet_down_forward.2} parent=5 // pred_check_branch
      %630 = sbr.rel (%p628) target = $region40
    $region39: #{unet_down_forward.2} parent=5 // pred_region
      %s631 = ssub.s32 %s10, 2
      // Predicated region
      $region41: #{unet_down_forward.2} parent=39 // pred_check
        %p632 = pneg %p100
      $region42: #{unet_down_forward.2} parent=39 // pred_check_branch
        %634 = sbr.rel (%p632) target = $region44
      $region43: #{unet_down_forward.2} parent=39 // pred_region
        %s635 = smul.u32 8, %s22
        %p636 = scmp.lt.s32.totalorder %s21, 1
        %s637 = scalar_select %p636, %s21, 1
        %p638 = scmp.lt.s32.totalorder %s635, 7
        %s639 = scalar_select %p638, %s635, 7
        %s640 = smul.addr %s637, 8
        %s641 = sadd.s32 %s639, %s640
        %s642 = smul.addr %s641, 4
        %s643 = scalar_lea.vmem %s2, %s642
      $region44: #{unet_down_forward.2} parent=39 // pred_fallthru
        _
      // Predicated region
      $region45: #{unet_down_forward.2} parent=39 // pred_check
        %p644 = pneg %p128
      $region46: #{unet_down_forward.2} parent=39 // pred_check_branch
        %646 = sbr.rel (%p644) target = $region48
      $region47: #{unet_down_forward.2} parent=39 // pred_region
        %p647 = scmp.lt.s32.totalorder %s21, 1
        %s648 = scalar_select %p647, %s21, 1
        %p649 = scmp.lt.s32.totalorder %s22, 0
        %s650 = scalar_select %p649, %s22, 0
        %s651 = sadd.s32 %s650, %s648
        %s652 = smul.addr %s651, 2
        %s653 = scalar_lea.vmem %s3, %s652
      $region48: #{unet_down_forward.2} parent=39 // pred_fallthru
        _
    $region40: #{unet_down_forward.2} parent=5 // pred_fallthru
      _
  $region6: #{unet_down_forward.2} parent=0 // loop_footer
    %s14 = sadd.s32 1, %s10
  $region7: #{unet_down_forward.2} parent=0 // loop_footer_branch
    %9 = sbr.rel target = $region3
  $region8: #{unet_down_forward.2} parent=0 // loop_exit
    _

</llo_original>
